<compile_context>
chip_gen: v6e
topology: v6e:2x2x1
jax: 0.10.0
libtpu: 0.0.40
codegen_flags: <defaults>
</compile_context>

<pallas_src>
import jax
import jax.numpy as jnp
from jax.experimental import pallas as pl
from jax.experimental.pallas import tpu as pltpu

STATE_IN = 64
ACTION_IN = 300
STATE_REP = STATE_IN // 2       # 32
ACTION_REP = ACTION_IN // 3     # 100
HID = 32
NEG_SLOPE = 0.2
EPS = 1e-7
MAX_TB = 2048                   # batch-tile cap (~6.3 MiB VMEM worst case)


def _leaky_relu(x):
    return jnp.where(x > 0, x, NEG_SLOPE * x)


def _round_up(x, m):
    return ((x + m - 1) // m) * m


def _woz_disc_kernel(state_ref, action_ref,
                     ws_ref, bs_ref,
                     wa_ref, ba_ref,
                     w1s_ref, w1a_ref, b1_ref,
                     w2_ref, b2_ref,
                     w3_ref, b3_ref,
                     out_ref):
    # state_rep / action_rep linear layers (MXU matmuls, f32 accumulation)
    state_1 = jnp.dot(state_ref[...], ws_ref[...],
                      preferred_element_type=jnp.float32) + bs_ref[...]
    action_1 = jnp.dot(action_ref[...], wa_ref[...],
                       preferred_element_type=jnp.float32) + ba_ref[...]

    # LeakyReLU is elementwise, so applying it to each half separately is
    # identical to LeakyReLU(concat(...)); Dropout = identity in eval mode.
    s_act = _leaky_relu(state_1)
    a_act = _leaky_relu(action_1)

    # Linear(132 -> 32) realized as split-W1 accumulation (no 132-wide concat).
    h = (jnp.dot(s_act, w1s_ref[...], preferred_element_type=jnp.float32)
         + jnp.dot(a_act, w1a_ref[...], preferred_element_type=jnp.float32)
         + b1_ref[...])
    h = _leaky_relu(h)

    # Linear(32 -> 32) + LeakyReLU
    h = _leaky_relu(jnp.dot(h, w2_ref[...],
                            preferred_element_type=jnp.float32) + b2_ref[...])

    # Linear(32 -> 1), sigmoid, clamp
    logits = jnp.dot(h, w3_ref[...],
                     preferred_element_type=jnp.float32) + b3_ref[...]
    out_ref[...] = jnp.clip(jax.nn.sigmoid(logits), EPS, 1.0 - EPS)


def woz_discriminator_forward(state, action, params, *, max_tb=MAX_TB):
    """state: [B, 64] f32, action: [B, 300] f32 -> [B, 1] f32."""
    B = state.shape[0]
    state = state.astype(jnp.float32)
    action = action.astype(jnp.float32)

    # Balanced batch tiling: tail padding is at most ~8 rows per tile.
    num_tiles = pl.cdiv(B, max_tb)
    TB = _round_up(pl.cdiv(B, num_tiles), 8)        # sublane-aligned
    B_pad = num_tiles * TB
    if B_pad != B:
        # Zero-pad the tail; padded rows are sliced off after the call.
        state = jnp.pad(state, ((0, B_pad - B), (0, 0)))
        action = jnp.pad(action, ((0, B_pad - B), (0, 0)))
    grid = (num_tiles,)

    # Split W1 [132, 32] into the state part [32, 32] and action part [100, 32]
    # so the kernel never builds a lane-misaligned 132-wide intermediate.
    w1 = params["w1"]
    w1s = w1[:STATE_REP, :]
    w1a = w1[STATE_REP:, :]

    weights = (params["ws"], params["bs"],
               params["wa"], params["ba"],
               w1s, w1a, params["b1"],
               params["w2"], params["b2"],
               params["w3"], params["b3"])
    args = (state, action) + weights

    def _resident(arr):
        # Full array as a single block; constant index_map keeps it resident
        # in VMEM (DMA'd once, reused across all grid steps).
        return pl.BlockSpec(arr.shape, lambda i: (0, 0))

    in_specs = [
        pl.BlockSpec((TB, STATE_IN), lambda i: (i, 0)),    # state tile
        pl.BlockSpec((TB, ACTION_IN), lambda i: (i, 0)),   # action tile (dominant stream)
    ] + [_resident(w) for w in weights]
    out_specs = pl.BlockSpec((TB, 1), lambda i: (i, 0))

    weight_bytes = 4 * sum(int(w.size) for w in weights)
    flops = 2 * B_pad * (STATE_IN * STATE_REP + ACTION_IN * ACTION_REP
                         + STATE_REP * HID + ACTION_REP * HID
                         + HID * HID + HID * 1)
    cost = pl.CostEstimate(
        flops=int(flops),
        transcendentals=int(B_pad),                     # one sigmoid per row
        bytes_accessed=int(4 * B_pad * (STATE_IN + ACTION_IN + 1) + weight_bytes),
    )

    out = pl.pallas_call(
        _woz_disc_kernel,
        out_shape=jax.ShapeDtypeStruct((B_pad, 1), jnp.float32),
        grid=grid,
        in_specs=in_specs,
        out_specs=out_specs,
        compiler_params=pltpu.CompilerParams(
            dimension_semantics=("parallel",)),         # shard batch across TCs on v7x
        cost_estimate=cost,
    )(*args)
    return out[:B]


# ---------------------------------------------------------------------------
# Parameter init + pure-JAX reference (for the self-check in __main__).
# ---------------------------------------------------------------------------

def _init_linear(key, fan_in, fan_out):
    """PyTorch-style init: U(-1/sqrt(fan_in), 1/sqrt(fan_in)).

    Weight returned as [fan_in, fan_out] (transposed vs. torch's [out, in])."""
    kw, kb = jax.random.split(key)
    bound = 1.0 / jnp.sqrt(jnp.float32(fan_in))
    w = jax.random.uniform(kw, (fan_in, fan_out), jnp.float32, -bound, bound)
    b = jax.random.uniform(kb, (1, fan_out), jnp.float32, -bound, bound)
    return w, b


def init_params(key):
    keys = jax.random.split(key, 5)
    ws, bs = _init_linear(keys[0], STATE_IN, STATE_REP)           # Linear(64, 32)
    wa, ba = _init_linear(keys[1], ACTION_IN, ACTION_REP)         # Linear(300, 100)
    w1, b1 = _init_linear(keys[2], STATE_REP + ACTION_REP, HID)   # Linear(132, 32)
    w2, b2 = _init_linear(keys[3], HID, HID)                      # Linear(32, 32)
    w3, b3 = _init_linear(keys[4], HID, 1)                        # Linear(32, 1)
    return {"ws": ws, "bs": bs, "wa": wa, "ba": ba,
            "w1": w1, "b1": b1, "w2": w2, "b2": b2,
            "w3": w3, "b3": b3}


def woz_discriminator_reference(state, action, params):
    state_1 = state @ params["ws"] + params["bs"]
    action_1 = action @ params["wa"] + params["ba"]
    h = _leaky_relu(jnp.concatenate([state_1, action_1], axis=1))
    h = _leaky_relu(h @ params["w1"] + params["b1"])
    h = _leaky_relu(h @ params["w2"] + params["b2"])
    v = jax.nn.sigmoid(h @ params["w3"] + params["b3"])
    return jnp.clip(v, EPS, 1.0 - EPS)


def _check(B, key):
    k_state, k_action, k_params = jax.random.split(key, 3)
    state = jax.random.normal(k_state, (B, STATE_IN), jnp.float32)
    action = jax.random.normal(k_action, (B, ACTION_IN), jnp.float32)
    params = init_params(k_params)

    out = woz_discriminator_forward(state, action, params)
    jax.block_until_ready(out)
    ref = woz_discriminator_reference(state, action, params)
    jax.block_until_ready(ref)

    assert out.shape == (B, 1)
    assert out.dtype == jnp.float32
    assert bool(jnp.all(out >= EPS)) and bool(jnp.all(out <= 1.0 - EPS))
    assert bool(jnp.allclose(out, ref, rtol=1e-5, atol=1e-5)), \
        f"mismatch vs reference at B={B}"


if __name__ == "__main__":
    key = jax.random.PRNGKey(0)
    k0, k1 = jax.random.split(key)
    _check(8, k0)     # sublane-aligned small batch
    _check(13, k1)    # ragged batch exercising the zero-pad tail path
    print("KERNEL_OK")
</pallas_src>

<mosaic_0001>
module attributes {stable_mosaic.version = 11 : i64} {
  func.func @_woz_disc_kernel(%arg0: i32, %arg1: memref<8x64xf32, #tpu.memory_space<vmem>>, %arg2: memref<8x300xf32, #tpu.memory_space<vmem>>, %arg3: memref<64x32xf32, #tpu.memory_space<vmem>>, %arg4: memref<1x32xf32, #tpu.memory_space<vmem>>, %arg5: memref<300x100xf32, #tpu.memory_space<vmem>>, %arg6: memref<1x100xf32, #tpu.memory_space<vmem>>, %arg7: memref<32x32xf32, #tpu.memory_space<vmem>>, %arg8: memref<100x32xf32, #tpu.memory_space<vmem>>, %arg9: memref<1x32xf32, #tpu.memory_space<vmem>>, %arg10: memref<32x32xf32, #tpu.memory_space<vmem>>, %arg11: memref<1x32xf32, #tpu.memory_space<vmem>>, %arg12: memref<32x1xf32, #tpu.memory_space<vmem>>, %arg13: memref<1x1xf32, #tpu.memory_space<vmem>>, %arg14: memref<8x1xf32, #tpu.memory_space<vmem>>) attributes {dimension_semantics = [#tpu.dimension_semantics<parallel>], iteration_bounds = array<i64: 1>, scalar_prefetch = 0 : i64, scratch_operands = 0 : i64, tpu.core_type = #tpu.core_type<tc>, window_params = [{transform_indices = @transform_0, window_bounds = array<i64: 8, 64>}, {transform_indices = @transform_1, window_bounds = array<i64: 8, 300>}, {pipeline_mode = #tpu.pipeline_mode<synchronous>, transform_indices = @transform_2, window_bounds = array<i64: 64, 32>}, {pipeline_mode = #tpu.pipeline_mode<synchronous>, transform_indices = @transform_3, window_bounds = array<i64: 1, 32>}, {pipeline_mode = #tpu.pipeline_mode<synchronous>, transform_indices = @transform_4, window_bounds = array<i64: 300, 100>}, {pipeline_mode = #tpu.pipeline_mode<synchronous>, transform_indices = @transform_5, window_bounds = array<i64: 1, 100>}, {pipeline_mode = #tpu.pipeline_mode<synchronous>, transform_indices = @transform_6, window_bounds = array<i64: 32, 32>}, {pipeline_mode = #tpu.pipeline_mode<synchronous>, transform_indices = @transform_7, window_bounds = array<i64: 100, 32>}, {pipeline_mode = #tpu.pipeline_mode<synchronous>, transform_indices = @transform_8, window_bounds = array<i64: 1, 32>}, {pipeline_mode = #tpu.pipeline_mode<synchronous>, transform_indices = @transform_9, window_bounds = array<i64: 32, 32>}, {pipeline_mode = #tpu.pipeline_mode<synchronous>, transform_indices = @transform_10, window_bounds = array<i64: 1, 32>}, {pipeline_mode = #tpu.pipeline_mode<synchronous>, transform_indices = @transform_11, window_bounds = array<i64: 32, 1>}, {pipeline_mode = #tpu.pipeline_mode<synchronous>, transform_indices = @transform_12, window_bounds = array<i64: 1, 1>}, {transform_indices = @transform_13, window_bounds = array<i64: 8, 1>}]} {
    %c0 = arith.constant 0 : index
    %c0_0 = arith.constant 0 : index
    %0 = vector.load %arg1[%c0, %c0_0] : memref<8x64xf32, #tpu.memory_space<vmem>>, vector<8x64xf32>
    %c0_1 = arith.constant 0 : index
    %c0_2 = arith.constant 0 : index
    %1 = vector.load %arg3[%c0_1, %c0_2] : memref<64x32xf32, #tpu.memory_space<vmem>>, vector<64x32xf32>
    %cst = arith.constant dense<0.000000e+00> : vector<8x32xf32>
    %2 = tpu.matmul %0, %1, %cst {dimension_numbers = #tpu.dot_dimension_numbers<[1], [0], [0], [1], [0, 0, 1, 1], [], []>} : vector<8x64xf32>, vector<64x32xf32>, vector<8x32xf32> -> vector<8x32xf32>
    %c0_3 = arith.constant 0 : index
    %c0_4 = arith.constant 0 : index
    %3 = vector.load %arg4[%c0_3, %c0_4] : memref<1x32xf32, #tpu.memory_space<vmem>>, vector<1x32xf32>
    %4 = vector.broadcast %3 : vector<1x32xf32> to vector<8x32xf32>
    %5 = arith.addf %2, %4 : vector<8x32xf32>
    %c0_5 = arith.constant 0 : index
    %c0_6 = arith.constant 0 : index
    %6 = vector.load %arg2[%c0_5, %c0_6] : memref<8x300xf32, #tpu.memory_space<vmem>>, vector<8x300xf32>
    %c0_7 = arith.constant 0 : index
    %c0_8 = arith.constant 0 : index
    %7 = vector.load %arg5[%c0_7, %c0_8] : memref<300x100xf32, #tpu.memory_space<vmem>>, vector<300x100xf32>
    %cst_9 = arith.constant dense<0.000000e+00> : vector<8x100xf32>
    %8 = tpu.matmul %6, %7, %cst_9 {dimension_numbers = #tpu.dot_dimension_numbers<[1], [0], [0], [1], [0, 0, 1, 1], [], []>} : vector<8x300xf32>, vector<300x100xf32>, vector<8x100xf32> -> vector<8x100xf32>
    %c0_10 = arith.constant 0 : index
    %c0_11 = arith.constant 0 : index
    %9 = vector.load %arg6[%c0_10, %c0_11] : memref<1x100xf32, #tpu.memory_space<vmem>>, vector<1x100xf32>
    %10 = vector.broadcast %9 : vector<1x100xf32> to vector<8x100xf32>
    %11 = arith.addf %8, %10 : vector<8x100xf32>
    %cst_12 = arith.constant 0.000000e+00 : f32
    %12 = vector.broadcast %cst_12 : f32 to vector<8x32xf32>
    %13 = arith.cmpf ogt, %5, %12 : vector<8x32xf32>
    %cst_13 = arith.constant 2.000000e-01 : f32
    %14 = vector.broadcast %cst_13 : f32 to vector<8x32xf32>
    %15 = arith.mulf %14, %5 : vector<8x32xf32>
    %16 = arith.select %13, %5, %15 : vector<8x32xi1>, vector<8x32xf32>
    %cst_14 = arith.constant 0.000000e+00 : f32
    %17 = vector.broadcast %cst_14 : f32 to vector<8x100xf32>
    %18 = arith.cmpf ogt, %11, %17 : vector<8x100xf32>
    %cst_15 = arith.constant 2.000000e-01 : f32
    %19 = vector.broadcast %cst_15 : f32 to vector<8x100xf32>
    %20 = arith.mulf %19, %11 : vector<8x100xf32>
    %21 = arith.select %18, %11, %20 : vector<8x100xi1>, vector<8x100xf32>
    %c0_16 = arith.constant 0 : index
    %c0_17 = arith.constant 0 : index
    %22 = vector.load %arg7[%c0_16, %c0_17] : memref<32x32xf32, #tpu.memory_space<vmem>>, vector<32x32xf32>
    %cst_18 = arith.constant dense<0.000000e+00> : vector<8x32xf32>
    %23 = tpu.matmul %16, %22, %cst_18 {dimension_numbers = #tpu.dot_dimension_numbers<[1], [0], [0], [1], [0, 0, 1, 1], [], []>} : vector<8x32xf32>, vector<32x32xf32>, vector<8x32xf32> -> vector<8x32xf32>
    %c0_19 = arith.constant 0 : index
    %c0_20 = arith.constant 0 : index
    %24 = vector.load %arg8[%c0_19, %c0_20] : memref<100x32xf32, #tpu.memory_space<vmem>>, vector<100x32xf32>
    %cst_21 = arith.constant dense<0.000000e+00> : vector<8x32xf32>
    %25 = tpu.matmul %21, %24, %cst_21 {dimension_numbers = #tpu.dot_dimension_numbers<[1], [0], [0], [1], [0, 0, 1, 1], [], []>} : vector<8x100xf32>, vector<100x32xf32>, vector<8x32xf32> -> vector<8x32xf32>
    %26 = arith.addf %23, %25 : vector<8x32xf32>
    %c0_22 = arith.constant 0 : index
    %c0_23 = arith.constant 0 : index
    %27 = vector.load %arg9[%c0_22, %c0_23] : memref<1x32xf32, #tpu.memory_space<vmem>>, vector<1x32xf32>
    %28 = vector.broadcast %27 : vector<1x32xf32> to vector<8x32xf32>
    %29 = arith.addf %26, %28 : vector<8x32xf32>
    %cst_24 = arith.constant 0.000000e+00 : f32
    %30 = vector.broadcast %cst_24 : f32 to vector<8x32xf32>
    %31 = arith.cmpf ogt, %29, %30 : vector<8x32xf32>
    %cst_25 = arith.constant 2.000000e-01 : f32
    %32 = vector.broadcast %cst_25 : f32 to vector<8x32xf32>
    %33 = arith.mulf %32, %29 : vector<8x32xf32>
    %34 = arith.select %31, %29, %33 : vector<8x32xi1>, vector<8x32xf32>
    %c0_26 = arith.constant 0 : index
    %c0_27 = arith.constant 0 : index
    %35 = vector.load %arg10[%c0_26, %c0_27] : memref<32x32xf32, #tpu.memory_space<vmem>>, vector<32x32xf32>
    %cst_28 = arith.constant dense<0.000000e+00> : vector<8x32xf32>
    %36 = tpu.matmul %34, %35, %cst_28 {dimension_numbers = #tpu.dot_dimension_numbers<[1], [0], [0], [1], [0, 0, 1, 1], [], []>} : vector<8x32xf32>, vector<32x32xf32>, vector<8x32xf32> -> vector<8x32xf32>
    %c0_29 = arith.constant 0 : index
    %c0_30 = arith.constant 0 : index
    %37 = vector.load %arg11[%c0_29, %c0_30] : memref<1x32xf32, #tpu.memory_space<vmem>>, vector<1x32xf32>
    %38 = vector.broadcast %37 : vector<1x32xf32> to vector<8x32xf32>
    %39 = arith.addf %36, %38 : vector<8x32xf32>
    %cst_31 = arith.constant 0.000000e+00 : f32
    %40 = vector.broadcast %cst_31 : f32 to vector<8x32xf32>
    %41 = arith.cmpf ogt, %39, %40 : vector<8x32xf32>
    %cst_32 = arith.constant 2.000000e-01 : f32
    %42 = vector.broadcast %cst_32 : f32 to vector<8x32xf32>
    %43 = arith.mulf %42, %39 : vector<8x32xf32>
    %44 = arith.select %41, %39, %43 : vector<8x32xi1>, vector<8x32xf32>
    %c0_33 = arith.constant 0 : index
    %c0_34 = arith.constant 0 : index
    %45 = vector.load %arg12[%c0_33, %c0_34] : memref<32x1xf32, #tpu.memory_space<vmem>>, vector<32x1xf32>
    %cst_35 = arith.constant dense<0.000000e+00> : vector<8x1xf32>
    %46 = tpu.matmul %44, %45, %cst_35 {dimension_numbers = #tpu.dot_dimension_numbers<[1], [0], [0], [1], [0, 0, 1, 1], [], []>} : vector<8x32xf32>, vector<32x1xf32>, vector<8x1xf32> -> vector<8x1xf32>
    %c0_36 = arith.constant 0 : index
    %c0_37 = arith.constant 0 : index
    %47 = vector.load %arg13[%c0_36, %c0_37] : memref<1x1xf32, #tpu.memory_space<vmem>>, vector<1x1xf32>
    %48 = vector.broadcast %47 : vector<1x1xf32> to vector<8x1xf32>
    %49 = arith.addf %46, %48 : vector<8x1xf32>
    %50 = arith.negf %49 : vector<8x1xf32>
    %51 = math.exp %50 : vector<8x1xf32>
    %cst_38 = arith.constant 1.000000e+00 : f32
    %52 = vector.broadcast %cst_38 : f32 to vector<8x1xf32>
    %53 = arith.addf %52, %51 : vector<8x1xf32>
    %54 = arith.divf %52, %53 : vector<8x1xf32>
    %cst_39 = arith.constant 1.000000e-07 : f32
    %cst_40 = arith.constant 0.99999988 : f32
    %55 = vector.broadcast %cst_39 : f32 to vector<8x1xf32>
    %56 = arith.maximumf %55, %54 : vector<8x1xf32>
    %57 = vector.broadcast %cst_40 : f32 to vector<8x1xf32>
    %58 = arith.minimumf %57, %56 : vector<8x1xf32>
    %c0_41 = arith.constant 0 : index
    %c0_42 = arith.constant 0 : index
    %59 = vector.load %arg14[%c0_41, %c0_42] : memref<8x1xf32, #tpu.memory_space<vmem>>, vector<8x1xf32>
    tpu.vector_store %arg14[%c0_41, %c0_42], %58 {strides = array<i32>} : memref<8x1xf32, #tpu.memory_space<vmem>>, vector<8x1xf32>,
    return
  }
  func.func @transform_0(%arg0: i32) -> (i32, i32) {
    %c0_i32 = arith.constant 0 : i32
    %c0_i32_0 = arith.constant 0 : i32
    return %arg0, %c0_i32 : i32, i32
  }
  func.func @transform_1(%arg0: i32) -> (i32, i32) {
    %c0_i32 = arith.constant 0 : i32
    %c0_i32_0 = arith.constant 0 : i32
    return %arg0, %c0_i32 : i32, i32
  }
  func.func @transform_2(%arg0: i32) -> (i32, i32) {
    %c0_i32 = arith.constant 0 : i32
    %c0_i32_0 = arith.constant 0 : i32
    %c0_i32_1 = arith.constant 0 : i32
    return %c0_i32, %c0_i32_0 : i32, i32
  }
  func.func @transform_3(%arg0: i32) -> (i32, i32) {
    %c0_i32 = arith.constant 0 : i32
    %c0_i32_0 = arith.constant 0 : i32
    %c0_i32_1 = arith.constant 0 : i32
    return %c0_i32, %c0_i32_0 : i32, i32
  }
  func.func @transform_4(%arg0: i32) -> (i32, i32) {
    %c0_i32 = arith.constant 0 : i32
    %c0_i32_0 = arith.constant 0 : i32
    %c0_i32_1 = arith.constant 0 : i32
    return %c0_i32, %c0_i32_0 : i32, i32
  }
  func.func @transform_5(%arg0: i32) -> (i32, i32) {
    %c0_i32 = arith.constant 0 : i32
    %c0_i32_0 = arith.constant 0 : i32
    %c0_i32_1 = arith.constant 0 : i32
    return %c0_i32, %c0_i32_0 : i32, i32
  }
  func.func @transform_6(%arg0: i32) -> (i32, i32) {
    %c0_i32 = arith.constant 0 : i32
    %c0_i32_0 = arith.constant 0 : i32
    %c0_i32_1 = arith.constant 0 : i32
    return %c0_i32, %c0_i32_0 : i32, i32
  }
  func.func @transform_7(%arg0: i32) -> (i32, i32) {
    %c0_i32 = arith.constant 0 : i32
    %c0_i32_0 = arith.constant 0 : i32
    %c0_i32_1 = arith.constant 0 : i32
    return %c0_i32, %c0_i32_0 : i32, i32
  }
  func.func @transform_8(%arg0: i32) -> (i32, i32) {
    %c0_i32 = arith.constant 0 : i32
    %c0_i32_0 = arith.constant 0 : i32
    %c0_i32_1 = arith.constant 0 : i32
    return %c0_i32, %c0_i32_0 : i32, i32
  }
  func.func @transform_9(%arg0: i32) -> (i32, i32) {
    %c0_i32 = arith.constant 0 : i32
    %c0_i32_0 = arith.constant 0 : i32
    %c0_i32_1 = arith.constant 0 : i32
    return %c0_i32, %c0_i32_0 : i32, i32
  }
  func.func @transform_10(%arg0: i32) -> (i32, i32) {
    %c0_i32 = arith.constant 0 : i32
    %c0_i32_0 = arith.constant 0 : i32
    %c0_i32_1 = arith.constant 0 : i32
    return %c0_i32, %c0_i32_0 : i32, i32
  }
  func.func @transform_11(%arg0: i32) -> (i32, i32) {
    %c0_i32 = arith.constant 0 : i32
    %c0_i32_0 = arith.constant 0 : i32
    %c0_i32_1 = arith.constant 0 : i32
    return %c0_i32, %c0_i32_0 : i32, i32
  }
  func.func @transform_12(%arg0: i32) -> (i32, i32) {
    %c0_i32 = arith.constant 0 : i32
    %c0_i32_0 = arith.constant 0 : i32
    %c0_i32_1 = arith.constant 0 : i32
    return %c0_i32, %c0_i32_0 : i32, i32
  }
  func.func @transform_13(%arg0: i32) -> (i32, i32) {
    %c0_i32 = arith.constant 0 : i32
    %c0_i32_0 = arith.constant 0 : i32
    return %arg0, %c0_i32 : i32, i32
  }
}

</mosaic_0001>

<llo_original>
// kernel: tpu_custom_call.1
$region0: #{tpu_custom_call.1}
  #allocation0 [shape = 'u32[]', space=smem, size = 0x4, offset = 0x4, fixed_abs, tag = 'smem constant byte address 0x4 - core index']
  #allocation1 [shape = 'u32[144,128]{1,0:T(1,128)}', space=vmem, size = 0x12000, scoped, tag = 'internal scratch']
  #allocation2 [shape = 'f32[1,1]{1,0:T(1,128)S(1)}', space=vmem, size = 0x200, scoped, tag = 'scoped memory for tpu_custom_call.1']
  %s0 = inlined_call_operand.vmem [shape: f32[8,64], index: 0, kind: input, shape index: {}]
  %s1 = inlined_call_operand.vmem [shape: f32[8,300], index: 1, kind: input, shape index: {}]
  %s2 = inlined_call_operand.vmem [shape: f32[64,32], index: 2, kind: input, shape index: {}]
  %s3 = inlined_call_operand.vmem [shape: f32[1,32], index: 3, kind: input, shape index: {}]
  %s4 = inlined_call_operand.hbm [shape: f32[300,100], index: 4, kind: input, shape index: {}]
  %s5 = inlined_call_operand.vmem [shape: f32[1,100], index: 5, kind: input, shape index: {}]
  %s6 = inlined_call_operand.vmem [shape: f32[32,32], index: 6, kind: input, shape index: {}]
  %s7 = inlined_call_operand.vmem [shape: f32[100,32], index: 7, kind: input, shape index: {}]
  %s8 = inlined_call_operand.vmem [shape: f32[1,32], index: 8, kind: input, shape index: {}]
  %s9 = inlined_call_operand.vmem [shape: f32[32,32], index: 9, kind: input, shape index: {}]
  %s10 = inlined_call_operand.vmem [shape: f32[1,32], index: 10, kind: input, shape index: {}]
  %s11 = inlined_call_operand.vmem [shape: f32[32,1], index: 11, kind: input, shape index: {}]
  %s12 = inlined_call_operand.<no memory space> [shape: f32[1,1], index: 12, kind: input, shape index: {}]
  %s13 = inlined_call_operand.vmem [shape: f32[8,1], index: 13, kind: output, shape index: {}]
  %s14 = sld [smem:[#allocation0]]
  $region66: #{tpu_custom_call.1} parent=0
    _
  %s16 = ssub.s32 1, %s14
  %s17 = scalar_select 0, %s16, %s14
  %v18 = vstv %s12
  %19 = vst [vmem:[#allocation2] sm:$0x1] %v18
  $region1: #{tpu_custom_call.1} parent=0
    #allocation3 [shape = 'u8[155648]{0}', space=vmem, size = 0x26000, scoped, tag = 'input window, operand 4, single buffered']
    #allocation4 [shape = 's32[1]{0}', space=sflag, size = 0x4, scoped, tag = 'scoped memory for tpu_custom_call.1']
    %20 = vsyncpa [#allocation4], 0
    // Predicated region
    $region2: #{tpu_custom_call.1} parent=1 // pred_check
      _
    $region3: #{tpu_custom_call.1} parent=1 // pred_check_branch
      %22 = sbr.rel (0) target = $region5
    $region4: #{tpu_custom_call.1} parent=1 // pred_region
      _
    $region5: #{tpu_custom_call.1} parent=1 // pred_fallthru
      _
    // Predicated region
    $region6: #{tpu_custom_call.1} parent=1 // pred_check
      _
    $region7: #{tpu_custom_call.1} parent=1 // pred_check_branch
      %24 = sbr.rel (0) target = $region9
    $region8: #{tpu_custom_call.1} parent=1 // pred_region
      _
    $region9: #{tpu_custom_call.1} parent=1 // pred_fallthru
      _
    // Predicated region
    $region10: #{tpu_custom_call.1} parent=1 // pred_check
      _
    $region11: #{tpu_custom_call.1} parent=1 // pred_check_branch
      %26 = sbr.rel (0) target = $region13
    $region12: #{tpu_custom_call.1} parent=1 // pred_region
      _
    $region13: #{tpu_custom_call.1} parent=1 // pred_fallthru
      _
    // Predicated region
    $region14: #{tpu_custom_call.1} parent=1 // pred_check
      _
    $region15: #{tpu_custom_call.1} parent=1 // pred_check_branch
      %28 = sbr.rel (0) target = $region17
    $region16: #{tpu_custom_call.1} parent=1 // pred_region
      _
    $region17: #{tpu_custom_call.1} parent=1 // pred_fallthru
      _
    // Predicated region
    $region18: #{tpu_custom_call.1} parent=1 // pred_check
      _
    $region19: #{tpu_custom_call.1} parent=1 // pred_check_branch
      %30 = sbr.rel (0) target = $region21
    $region20: #{tpu_custom_call.1} parent=1 // pred_region
      %s32 = ssub.s32 4864, 4864
      %33 = vsyncadd [#allocation4], %s32
      %s34 = sshll.u32 [#allocation3], 4
      %s35 = int_to_ptr.vmem [resolvable:$true] %s34
      %40 = dma.hbm_to_vmem [thread:$0]  %s4, 4864, %s35, [#allocation4], 128, 128, 8
    $region21: #{tpu_custom_call.1} parent=1 // pred_fallthru
      _
    // Predicated region
    $region22: #{tpu_custom_call.1} parent=1 // pred_check
      _
    $region23: #{tpu_custom_call.1} parent=1 // pred_check_branch
      %42 = sbr.rel (0) target = $region25
    $region24: #{tpu_custom_call.1} parent=1 // pred_region
      _
    $region25: #{tpu_custom_call.1} parent=1 // pred_fallthru
      _
    // Predicated region
    $region26: #{tpu_custom_call.1} parent=1 // pred_check
      _
    $region27: #{tpu_custom_call.1} parent=1 // pred_check_branch
      %44 = sbr.rel (0) target = $region29
    $region28: #{tpu_custom_call.1} parent=1 // pred_region
      _
    $region29: #{tpu_custom_call.1} parent=1 // pred_fallthru
      _
    // Predicated region
    $region30: #{tpu_custom_call.1} parent=1 // pred_check
      _
    $region31: #{tpu_custom_call.1} parent=1 // pred_check_branch
      %46 = sbr.rel (0) target = $region33
    $region32: #{tpu_custom_call.1} parent=1 // pred_region
      _
    $region33: #{tpu_custom_call.1} parent=1 // pred_fallthru
      _
    // Predicated region
    $region34: #{tpu_custom_call.1} parent=1 // pred_check
      _
    $region35: #{tpu_custom_call.1} parent=1 // pred_check_branch
      %48 = sbr.rel (0) target = $region37
    $region36: #{tpu_custom_call.1} parent=1 // pred_region
      _
    $region37: #{tpu_custom_call.1} parent=1 // pred_fallthru
      _
    // Predicated region
    $region38: #{tpu_custom_call.1} parent=1 // pred_check
      _
    $region39: #{tpu_custom_call.1} parent=1 // pred_check_branch
      %50 = sbr.rel (0) target = $region41
    $region40: #{tpu_custom_call.1} parent=1 // pred_region
      _
    $region41: #{tpu_custom_call.1} parent=1 // pred_fallthru
      _
    // Predicated region
    $region42: #{tpu_custom_call.1} parent=1 // pred_check
      _
    $region43: #{tpu_custom_call.1} parent=1 // pred_check_branch
      %52 = sbr.rel (0) target = $region45
    $region44: #{tpu_custom_call.1} parent=1 // pred_region
      _
    $region45: #{tpu_custom_call.1} parent=1 // pred_fallthru
      _
    // Predicated region
    $region46: #{tpu_custom_call.1} parent=1 // pred_check
      _
    $region47: #{tpu_custom_call.1} parent=1 // pred_check_branch
      %54 = sbr.rel (0) target = $region49
    $region48: #{tpu_custom_call.1} parent=1 // pred_region
      _
    $region49: #{tpu_custom_call.1} parent=1 // pred_fallthru
      _
    // Predicated region
    $region50: #{tpu_custom_call.1} parent=1 // pred_check
      _
    $region51: #{tpu_custom_call.1} parent=1 // pred_check_branch
      %56 = sbr.rel (0) target = $region53
    $region52: #{tpu_custom_call.1} parent=1 // pred_region
      _
    $region53: #{tpu_custom_call.1} parent=1 // pred_fallthru
      _
    // Predicated region
    $region54: #{tpu_custom_call.1} parent=1 // pred_check
      _
    $region55: #{tpu_custom_call.1} parent=1 // pred_check_branch
      %58 = sbr.rel (0) target = $region57
    $region56: #{tpu_custom_call.1} parent=1 // pred_region
      %59 = dma.done [#allocation4], 4864
    $region57: #{tpu_custom_call.1} parent=1 // pred_fallthru
      _
    %v60 = vld [vmem:[%s0] sm:$0xff]
    %v61 = vld [vmem:[%s2] sm:$0xff]
    %v62 = vld [vmem:[%s2 + $0x8] sm:$0xff]
    %v63 = vld [vmem:[%s2 + $0x10] sm:$0xff]
    %v64 = vld [vmem:[%s2 + $0x18] sm:$0xff]
    %v65 = vld [vmem:[%s2 + $0x20] sm:$0xff]
    %v66 = vld [vmem:[%s2 + $0x28] sm:$0xff]
    %v67 = vld [vmem:[%s2 + $0x30] sm:$0xff]
    %v68 = vld [vmem:[%s2 + $0x38] sm:$0xff]
    %v69 = vld [vmem:[%s3] sm:$0x1]
    %v71 = vlaneseq
    %v72 = vshrl.u32 %v71, 7
    %v73 = vsub.s32 0, %v72
    %v74 = vrot.slane %v69, %v73
    %vm76 = vcmask 523264
    %v78 = vsel %vm76, %v60, 0
    %80 = vmatprep.subr.mxu0 0.0
    %81 = vmatpush1.msra.mxu0 0.0
    %82 = vmatprep.subr.mxu0 0.0
    %83 = vmatpush1.msra.mxu0 0.0
    %84 = vmatprep.subr.mxu0 0.0
    %85 = vmatpush1.msra.mxu0 0.0
    %86 = vmatprep.subr.mxu0 0.0
    %87 = vmatpush1.msra.mxu0 0.0
    %88 = vmatprep.subr.mxu0 0.0
    %89 = vmatpush1.msra.mxu0 0.0
    %90 = vmatprep.subr.mxu0 0.0
    %91 = vmatpush1.msra.mxu0 0.0
    %92 = vmatprep.subr.mxu0 0.0
    %93 = vmatpush1.msra.mxu0 0.0
    %94 = vmatprep.subr.mxu0 0.0
    %95 = vmatpush1.msra.mxu0 0.0
    %96 = vmatprep.subr.mxu0 0.0
    %97 = vmatpush1.msra.mxu0 %v68
    %98 = vmatprep.subr.mxu0 0.0
    %99 = vmatpush1.msra.mxu0 %v67
    %100 = vmatprep.subr.mxu0 0.0
    %101 = vmatpush1.msra.mxu0 %v66
    %102 = vmatprep.subr.mxu0 0.0
    %103 = vmatpush1.msra.mxu0 %v65
    %104 = vmatprep.subr.mxu0 0.0
    %105 = vmatpush1.msra.mxu0 %v64
    %106 = vmatprep.subr.mxu0 0.0
    %107 = vmatpush1.msra.mxu0 %v63
    %108 = vmatprep.subr.mxu0 0.0
    %109 = vmatpush1.msra.mxu0 %v62
    %110 = vmatprep.subr.mxu0 0.0
    %111 = vmatpush1.msra.mxu0 %v61
    %112 = vmatprep.subr.mxu0 0.0
    %113 = vmatpush2.msra.mxu0 0.0
    %114 = vmatprep.subr.mxu0 0.0
    %115 = vmatpush2.msra.mxu0 0.0
    %116 = vmatprep.subr.mxu0 0.0
    %117 = vmatpush2.msra.mxu0 0.0
    %118 = vmatprep.subr.mxu0 0.0
    %119 = vmatpush2.msra.mxu0 0.0
    %120 = vmatprep.subr.mxu0 0.0
    %121 = vmatpush2.msra.mxu0 0.0
    %122 = vmatprep.subr.mxu0 0.0
    %123 = vmatpush2.msra.mxu0 0.0
    %124 = vmatprep.subr.mxu0 0.0
    %125 = vmatpush2.msra.mxu0 0.0
    %126 = vmatprep.subr.mxu0 0.0
    %127 = vmatpush2.msra.mxu0 0.0
    %128 = vmatprep.subr.mxu0 0.0
    %129 = vmatpush2.msra.mxu0 0.0
    %130 = vmatprep.subr.mxu0 0.0
    %131 = vmatpush2.msra.mxu0 0.0
    %132 = vmatprep.subr.mxu0 0.0
    %133 = vmatpush2.msra.mxu0 0.0
    %134 = vmatprep.subr.mxu0 0.0
    %135 = vmatpush2.msra.mxu0 0.0
    %136 = vmatprep.subr.mxu0 0.0
    %137 = vmatpush2.msra.mxu0 0.0
    %138 = vmatprep.subr.mxu0 0.0
    %139 = vmatpush2.msra.mxu0 0.0
    %140 = vmatprep.subr.mxu0 0.0
    %141 = vmatpush2.msra.mxu0 0.0
    %142 = vmatprep.subr.mxu0 0.0
    %143 = vmatpush2.msra.mxu0 0.0
    %144 = vmatprep.mubr.f32.mxu0 0.0
    %145 = vmatmul.mubr.f32.gmra.mxu0 %v78
    %v146 = vpop.f32.mrf.mxu0
    %v147 = vadd.f32 %v74, %v146
    %v148 = vpop.f32.mrf.mxu0
    %149 = vdwg.mxu0
    %v150 = vld [vmem:[%s1] sm:$0xff]
    %v151 = vld [vmem:[%s1 + $0x8] sm:$0xff]
    %v152 = vld [vmem:[%s1 + $0x10] sm:$0xff]
    %v153 = vld [vmem:[#allocation3] sm:$0xff]
    %v154 = vld [vmem:[#allocation3 + $0x8] sm:$0xff]
    %v155 = vld [vmem:[#allocation3 + $0x10] sm:$0xff]
    %v156 = vld [vmem:[#allocation3 + $0x18] sm:$0xff]
    %v157 = vld [vmem:[#allocation3 + $0x20] sm:$0xff]
    %v158 = vld [vmem:[#allocation3 + $0x28] sm:$0xff]
    %v159 = vld [vmem:[#allocation3 + $0x30] sm:$0xff]
    %v160 = vld [vmem:[#allocation3 + $0x38] sm:$0xff]
    %v161 = vld [vmem:[#allocation3 + $0x40] sm:$0xff]
    %v162 = vld [vmem:[#allocation3 + $0x48] sm:$0xff]
    %v163 = vld [vmem:[#allocation3 + $0x50] sm:$0xff]
    %v164 = vld [vmem:[#allocation3 + $0x58] sm:$0xff]
    %v165 = vld [vmem:[#allocation3 + $0x60] sm:$0xff]
    %v166 = vld [vmem:[#allocation3 + $0x68] sm:$0xff]
    %v167 = vld [vmem:[#allocation3 + $0x70] sm:$0xff]
    %v168 = vld [vmem:[#allocation3 + $0x78] sm:$0xff]
    %v169 = vld [vmem:[#allocation3 + $0x80] sm:$0xff]
    %v170 = vld [vmem:[#allocation3 + $0x88] sm:$0xff]
    %v171 = vld [vmem:[#allocation3 + $0x90] sm:$0xff]
    %v172 = vld [vmem:[#allocation3 + $0x98] sm:$0xff]
    %v173 = vld [vmem:[#allocation3 + $0xa0] sm:$0xff]
    %v174 = vld [vmem:[#allocation3 + $0xa8] sm:$0xff]
    %v175 = vld [vmem:[#allocation3 + $0xb0] sm:$0xff]
    %v176 = vld [vmem:[#allocation3 + $0xb8] sm:$0xff]
    %v177 = vld [vmem:[#allocation3 + $0xc0] sm:$0xff]
    %v178 = vld [vmem:[#allocation3 + $0xc8] sm:$0xff]
    %v179 = vld [vmem:[#allocation3 + $0xd0] sm:$0xff]
    %v180 = vld [vmem:[#allocation3 + $0xd8] sm:$0xff]
    %v181 = vld [vmem:[#allocation3 + $0xe0] sm:$0xff]
    %v182 = vld [vmem:[#allocation3 + $0xe8] sm:$0xff]
    %v183 = vld [vmem:[#allocation3 + $0xf0] sm:$0xff]
    %v184 = vld [vmem:[#allocation3 + $0xf8] sm:$0xff]
    %v185 = vld [vmem:[#allocation3 + $0x100] sm:$0xff]
    %v186 = vld [vmem:[#allocation3 + $0x108] sm:$0xff]
    %v187 = vld [vmem:[#allocation3 + $0x110] sm:$0xff]
    %v188 = vld [vmem:[#allocation3 + $0x118] sm:$0xff]
    %v189 = vld [vmem:[#allocation3 + $0x120] sm:$0xff]
    %v190 = vld [vmem:[#allocation3 + $0x128] sm:$0xf]
    %v191 = vld [vmem:[%s5] sm:$0x1]
    %v193 = vlaneseq
    %v194 = vshrl.u32 %v193, 7
    %v195 = vsub.s32 0, %v194
    %v196 = vrot.slane %v191, %v195
    %vm198 = vcmask 359424
    %v200 = vsel %vm198, %v152, 0
    %vm202 = vcmask 1043456
    %v204 = vsel %vm202, %v190, 0
    %206 = vmatprep.subr.mxu0 0.0
    %207 = vmatpush1.msra.mxu0 %v168
    %208 = vmatprep.subr.mxu0 0.0
    %209 = vmatpush1.msra.mxu0 %v167
    %210 = vmatprep.subr.mxu0 0.0
    %211 = vmatpush1.msra.mxu0 %v166
    %212 = vmatprep.subr.mxu0 0.0
    %213 = vmatpush1.msra.mxu0 %v165
    %214 = vmatprep.subr.mxu0 0.0
    %215 = vmatpush1.msra.mxu0 %v164
    %216 = vmatprep.subr.mxu0 0.0
    %217 = vmatpush1.msra.mxu0 %v163
    %218 = vmatprep.subr.mxu0 0.0
    %219 = vmatpush1.msra.mxu0 %v162
    %220 = vmatprep.subr.mxu0 0.0
    %221 = vmatpush1.msra.mxu0 %v161
    %222 = vmatprep.subr.mxu0 0.0
    %223 = vmatpush1.msra.mxu0 %v160
    %224 = vmatprep.subr.mxu0 0.0
    %225 = vmatpush1.msra.mxu0 %v159
    %226 = vmatprep.subr.mxu0 0.0
    %227 = vmatpush1.msra.mxu0 %v158
    %228 = vmatprep.subr.mxu0 0.0
    %229 = vmatpush1.msra.mxu0 %v157
    %230 = vmatprep.subr.mxu0 0.0
    %231 = vmatpush1.msra.mxu0 %v156
    %232 = vmatprep.subr.mxu0 0.0
    %233 = vmatpush1.msra.mxu0 %v155
    %234 = vmatprep.subr.mxu0 0.0
    %235 = vmatpush1.msra.mxu0 %v154
    %236 = vmatprep.subr.mxu0 0.0
    %237 = vmatpush1.msra.mxu0 %v153
    %238 = vmatprep.subr.mxu0 0.0
    %239 = vmatpush2.msra.mxu0 %v184
    %240 = vmatprep.subr.mxu0 0.0
    %241 = vmatpush2.msra.mxu0 %v183
    %242 = vmatprep.subr.mxu0 0.0
    %243 = vmatpush2.msra.mxu0 %v182
    %244 = vmatprep.subr.mxu0 0.0
    %245 = vmatpush2.msra.mxu0 %v181
    %246 = vmatprep.subr.mxu0 0.0
    %247 = vmatpush2.msra.mxu0 %v180
    %248 = vmatprep.subr.mxu0 0.0
    %249 = vmatpush2.msra.mxu0 %v179
    %250 = vmatprep.subr.mxu0 0.0
    %251 = vmatpush2.msra.mxu0 %v178
    %252 = vmatprep.subr.mxu0 0.0
    %253 = vmatpush2.msra.mxu0 %v177
    %254 = vmatprep.subr.mxu0 0.0
    %255 = vmatpush2.msra.mxu0 %v176
    %256 = vmatprep.subr.mxu0 0.0
    %257 = vmatpush2.msra.mxu0 %v175
    %258 = vmatprep.subr.mxu0 0.0
    %259 = vmatpush2.msra.mxu0 %v174
    %260 = vmatprep.subr.mxu0 0.0
    %261 = vmatpush2.msra.mxu0 %v173
    %262 = vmatprep.subr.mxu0 0.0
    %263 = vmatpush2.msra.mxu0 %v172
    %264 = vmatprep.subr.mxu0 0.0
    %265 = vmatpush2.msra.mxu0 %v171
    %266 = vmatprep.subr.mxu0 0.0
    %267 = vmatpush2.msra.mxu0 %v170
    %268 = vmatprep.subr.mxu0 0.0
    %269 = vmatpush2.msra.mxu0 %v169
    %270 = vmatprep.mubr.f32.mxu0 %v151
    %271 = vmatmul.mubr.f32.gmra.mxu0 %v150
    %v272 = vpop.f32.mrf.mxu0
    %v273 = vadd.f32 %v196, %v272
    %v274 = vpop.f32.mrf.mxu0
    %275 = vdwg.mxu0
    %276 = vmatprep.subr.mxu0 0.0
    %277 = vmatpush1.msra.mxu0 0.0
    %278 = vmatprep.subr.mxu0 0.0
    %279 = vmatpush1.msra.mxu0 0.0
    %280 = vmatprep.subr.mxu0 0.0
    %281 = vmatpush1.msra.mxu0 0.0
    %282 = vmatprep.subr.mxu0 0.0
    %283 = vmatpush1.msra.mxu0 0.0
    %284 = vmatprep.subr.mxu0 0.0
    %285 = vmatpush1.msra.mxu0 0.0
    %286 = vmatprep.subr.mxu0 0.0
    %287 = vmatpush1.msra.mxu0 0.0
    %288 = vmatprep.subr.mxu0 0.0
    %289 = vmatpush1.msra.mxu0 0.0
    %290 = vmatprep.subr.mxu0 0.0
    %291 = vmatpush1.msra.mxu0 0.0
    %292 = vmatprep.subr.mxu0 0.0
    %293 = vmatpush1.msra.mxu0 0.0
    %294 = vmatprep.subr.mxu0 0.0
    %295 = vmatpush1.msra.mxu0 0.0
    %296 = vmatprep.subr.mxu0 0.0
    %297 = vmatpush1.msra.mxu0 %v204
    %298 = vmatprep.subr.mxu0 0.0
    %299 = vmatpush1.msra.mxu0 %v189
    %300 = vmatprep.subr.mxu0 0.0
    %301 = vmatpush1.msra.mxu0 %v188
    %302 = vmatprep.subr.mxu0 0.0
    %303 = vmatpush1.msra.mxu0 %v187
    %304 = vmatprep.subr.mxu0 0.0
    %305 = vmatpush1.msra.mxu0 %v186
    %306 = vmatprep.subr.mxu0 0.0
    %307 = vmatpush1.msra.mxu0 %v185
    %308 = vmatprep.subr.mxu0 0.0
    %309 = vmatpush2.msra.mxu0 0.0
    %310 = vmatprep.subr.mxu0 0.0
    %311 = vmatpush2.msra.mxu0 0.0
    %312 = vmatprep.subr.mxu0 0.0
    %313 = vmatpush2.msra.mxu0 0.0
    %314 = vmatprep.subr.mxu0 0.0
    %315 = vmatpush2.msra.mxu0 0.0
    %316 = vmatprep.subr.mxu0 0.0
    %317 = vmatpush2.msra.mxu0 0.0
    %318 = vmatprep.subr.mxu0 0.0
    %319 = vmatpush2.msra.mxu0 0.0
    %320 = vmatprep.subr.mxu0 0.0
    %321 = vmatpush2.msra.mxu0 0.0
    %322 = vmatprep.subr.mxu0 0.0
    %323 = vmatpush2.msra.mxu0 0.0
    %324 = vmatprep.subr.mxu0 0.0
    %325 = vmatpush2.msra.mxu0 0.0
    %326 = vmatprep.subr.mxu0 0.0
    %327 = vmatpush2.msra.mxu0 0.0
    %328 = vmatprep.subr.mxu0 0.0
    %329 = vmatpush2.msra.mxu0 0.0
    %330 = vmatprep.subr.mxu0 0.0
    %331 = vmatpush2.msra.mxu0 0.0
    %332 = vmatprep.subr.mxu0 0.0
    %333 = vmatpush2.msra.mxu0 0.0
    %334 = vmatprep.subr.mxu0 0.0
    %335 = vmatpush2.msra.mxu0 0.0
    %336 = vmatprep.subr.mxu0 0.0
    %337 = vmatpush2.msra.mxu0 0.0
    %338 = vmatprep.subr.mxu0 0.0
    %339 = vmatpush2.msra.mxu0 0.0
    %340 = vmatprep.mubr.f32.mxu0 0.0
    %341 = vmatmul.mubr.f32.gmra.mxu0 %v200
    %v342 = vpop.f32.mrf.mxu0
    %v343 = vadd.f32 %v273, %v342
    %v344 = vpop.f32.mrf.mxu0
    %345 = vdwg.mxu0
    %vm346 = vcmp.gt.f32.partialorder %v147, 0.0
    %v347 = vmul.f32 %v147, 0.2
    %v348 = vsel %vm346, %v147, %v347
    %vm349 = vcmp.gt.f32.partialorder %v343, 0.0
    %v350 = vmul.f32 %v343, 0.2
    %v351 = vsel %vm349, %v343, %v350
    %v352 = vld [vmem:[%s6] sm:$0xff]
    %v353 = vld [vmem:[%s6 + $0x8] sm:$0xff]
    %v354 = vld [vmem:[%s6 + $0x10] sm:$0xff]
    %v355 = vld [vmem:[%s6 + $0x18] sm:$0xff]
    %v356 = vld [vmem:[%s7] sm:$0xff]
    %v357 = vld [vmem:[%s7 + $0x8] sm:$0xff]
    %v358 = vld [vmem:[%s7 + $0x10] sm:$0xff]
    %v359 = vld [vmem:[%s7 + $0x18] sm:$0xff]
    %v360 = vld [vmem:[%s7 + $0x20] sm:$0xff]
    %v361 = vld [vmem:[%s7 + $0x28] sm:$0xff]
    %v362 = vld [vmem:[%s7 + $0x30] sm:$0xff]
    %v363 = vld [vmem:[%s7 + $0x38] sm:$0xff]
    %v364 = vld [vmem:[%s7 + $0x40] sm:$0xff]
    %v365 = vld [vmem:[%s7 + $0x48] sm:$0xff]
    %v366 = vld [vmem:[%s7 + $0x50] sm:$0xff]
    %v367 = vld [vmem:[%s7 + $0x58] sm:$0xff]
    %v368 = vld [vmem:[%s7 + $0x60] sm:$0xf]
    %vm369 = vcmask 818176
    %v371 = vsel %vm369, %v351, 0
    %v374 = vsel %vm202, %v368, 0
    %376 = vmatprep.subr.mxu0 0.0
    %377 = vmatpush1.msra.mxu0 0.0
    %378 = vmatprep.subr.mxu0 0.0
    %379 = vmatpush1.msra.mxu0 0.0
    %380 = vmatprep.subr.mxu0 0.0
    %381 = vmatpush1.msra.mxu0 0.0
    %382 = vmatprep.subr.mxu0 0.0
    %383 = vmatpush1.msra.mxu0 %v374
    %384 = vmatprep.subr.mxu0 0.0
    %385 = vmatpush1.msra.mxu0 %v367
    %386 = vmatprep.subr.mxu0 0.0
    %387 = vmatpush1.msra.mxu0 %v366
    %388 = vmatprep.subr.mxu0 0.0
    %389 = vmatpush1.msra.mxu0 %v365
    %390 = vmatprep.subr.mxu0 0.0
    %391 = vmatpush1.msra.mxu0 %v364
    %392 = vmatprep.subr.mxu0 0.0
    %393 = vmatpush1.msra.mxu0 %v363
    %394 = vmatprep.subr.mxu0 0.0
    %395 = vmatpush1.msra.mxu0 %v362
    %396 = vmatprep.subr.mxu0 0.0
    %397 = vmatpush1.msra.mxu0 %v361
    %398 = vmatprep.subr.mxu0 0.0
    %399 = vmatpush1.msra.mxu0 %v360
    %400 = vmatprep.subr.mxu0 0.0
    %401 = vmatpush1.msra.mxu0 %v359
    %402 = vmatprep.subr.mxu0 0.0
    %403 = vmatpush1.msra.mxu0 %v358
    %404 = vmatprep.subr.mxu0 0.0
    %405 = vmatpush1.msra.mxu0 %v357
    %406 = vmatprep.subr.mxu0 0.0
    %407 = vmatpush1.msra.mxu0 %v356
    %408 = vmatprep.subr.mxu0 0.0
    %409 = vmatpush2.msra.mxu0 0.0
    %410 = vmatprep.subr.mxu0 0.0
    %411 = vmatpush2.msra.mxu0 0.0
    %412 = vmatprep.subr.mxu0 0.0
    %413 = vmatpush2.msra.mxu0 0.0
    %414 = vmatprep.subr.mxu0 0.0
    %415 = vmatpush2.msra.mxu0 0.0
    %416 = vmatprep.subr.mxu0 0.0
    %417 = vmatpush2.msra.mxu0 0.0
    %418 = vmatprep.subr.mxu0 0.0
    %419 = vmatpush2.msra.mxu0 0.0
    %420 = vmatprep.subr.mxu0 0.0
    %421 = vmatpush2.msra.mxu0 0.0
    %422 = vmatprep.subr.mxu0 0.0
    %423 = vmatpush2.msra.mxu0 0.0
    %424 = vmatprep.subr.mxu0 0.0
    %425 = vmatpush2.msra.mxu0 0.0
    %426 = vmatprep.subr.mxu0 0.0
    %427 = vmatpush2.msra.mxu0 0.0
    %428 = vmatprep.subr.mxu0 0.0
    %429 = vmatpush2.msra.mxu0 0.0
    %430 = vmatprep.subr.mxu0 0.0
    %431 = vmatpush2.msra.mxu0 0.0
    %432 = vmatprep.subr.mxu0 0.0
    %433 = vmatpush2.msra.mxu0 0.0
    %434 = vmatprep.subr.mxu0 0.0
    %435 = vmatpush2.msra.mxu0 0.0
    %436 = vmatprep.subr.mxu0 0.0
    %437 = vmatpush2.msra.mxu0 0.0
    %438 = vmatprep.subr.mxu0 0.0
    %439 = vmatpush2.msra.mxu0 0.0
    %440 = vmatprep.mubr.f32.mxu0 0.0
    %441 = vmatmul.mubr.f32.gmra.mxu0 %v371
    %v442 = vpop.f32.mrf.mxu0
    %v443 = vadd.f32 0.0, %v442
    %v444 = vpop.f32.mrf.mxu0
    %445 = vdwg.mxu0
    %vm446 = vcmask 261120
    %v448 = vsel %vm446, %v348, 0
    %450 = vmatprep.subr.mxu0 0.0
    %451 = vmatpush1.msra.mxu0 0.0
    %452 = vmatprep.subr.mxu0 0.0
    %453 = vmatpush1.msra.mxu0 0.0
    %454 = vmatprep.subr.mxu0 0.0
    %455 = vmatpush1.msra.mxu0 0.0
    %456 = vmatprep.subr.mxu0 0.0
    %457 = vmatpush1.msra.mxu0 0.0
    %458 = vmatprep.subr.mxu0 0.0
    %459 = vmatpush1.msra.mxu0 0.0
    %460 = vmatprep.subr.mxu0 0.0
    %461 = vmatpush1.msra.mxu0 0.0
    %462 = vmatprep.subr.mxu0 0.0
    %463 = vmatpush1.msra.mxu0 0.0
    %464 = vmatprep.subr.mxu0 0.0
    %465 = vmatpush1.msra.mxu0 0.0
    %466 = vmatprep.subr.mxu0 0.0
    %467 = vmatpush1.msra.mxu0 0.0
    %468 = vmatprep.subr.mxu0 0.0
    %469 = vmatpush1.msra.mxu0 0.0
    %470 = vmatprep.subr.mxu0 0.0
    %471 = vmatpush1.msra.mxu0 0.0
    %472 = vmatprep.subr.mxu0 0.0
    %473 = vmatpush1.msra.mxu0 0.0
    %474 = vmatprep.subr.mxu0 0.0
    %475 = vmatpush1.msra.mxu0 %v355
    %476 = vmatprep.subr.mxu0 0.0
    %477 = vmatpush1.msra.mxu0 %v354
    %478 = vmatprep.subr.mxu0 0.0
    %479 = vmatpush1.msra.mxu0 %v353
    %480 = vmatprep.subr.mxu0 0.0
    %481 = vmatpush1.msra.mxu0 %v352
    %482 = vmatprep.subr.mxu0 0.0
    %483 = vmatpush2.msra.mxu0 0.0
    %484 = vmatprep.subr.mxu0 0.0
    %485 = vmatpush2.msra.mxu0 0.0
    %486 = vmatprep.subr.mxu0 0.0
    %487 = vmatpush2.msra.mxu0 0.0
    %488 = vmatprep.subr.mxu0 0.0
    %489 = vmatpush2.msra.mxu0 0.0
    %490 = vmatprep.subr.mxu0 0.0
    %491 = vmatpush2.msra.mxu0 0.0
    %492 = vmatprep.subr.mxu0 0.0
    %493 = vmatpush2.msra.mxu0 0.0
    %494 = vmatprep.subr.mxu0 0.0
    %495 = vmatpush2.msra.mxu0 0.0
    %496 = vmatprep.subr.mxu0 0.0
    %497 = vmatpush2.msra.mxu0 0.0
    %498 = vmatprep.subr.mxu0 0.0
    %499 = vmatpush2.msra.mxu0 0.0
    %500 = vmatprep.subr.mxu0 0.0
    %501 = vmatpush2.msra.mxu0 0.0
    %502 = vmatprep.subr.mxu0 0.0
    %503 = vmatpush2.msra.mxu0 0.0
    %504 = vmatprep.subr.mxu0 0.0
    %505 = vmatpush2.msra.mxu0 0.0
    %506 = vmatprep.subr.mxu0 0.0
    %507 = vmatpush2.msra.mxu0 0.0
    %508 = vmatprep.subr.mxu0 0.0
    %509 = vmatpush2.msra.mxu0 0.0
    %510 = vmatprep.subr.mxu0 0.0
    %511 = vmatpush2.msra.mxu0 0.0
    %512 = vmatprep.subr.mxu0 0.0
    %513 = vmatpush2.msra.mxu0 0.0
    %514 = vmatprep.mubr.f32.mxu0 0.0
    %515 = vmatmul.mubr.f32.gmra.mxu0 %v448
    %v516 = vpop.f32.mrf.mxu0
    %v517 = vadd.f32 %v443, %v516
    %v518 = vpop.f32.mrf.mxu0
    %519 = vdwg.mxu0
    %v520 = vld [vmem:[%s8] sm:$0x1]
    %v522 = vlaneseq
    %v523 = vshrl.u32 %v522, 7
    %v524 = vsub.s32 0, %v523
    %v525 = vrot.slane %v520, %v524
    %v527 = vadd.f32 %v517, %v525
    %vm528 = vcmp.gt.f32.partialorder %v527, 0.0
    %v529 = vmul.f32 %v527, 0.2
    %v530 = vsel %vm528, %v527, %v529
    %v531 = vld [vmem:[%s9] sm:$0xff]
    %v532 = vld [vmem:[%s9 + $0x8] sm:$0xff]
    %v533 = vld [vmem:[%s9 + $0x10] sm:$0xff]
    %v534 = vld [vmem:[%s9 + $0x18] sm:$0xff]
    %v535 = vld [vmem:[%s10] sm:$0x1]
    %v537 = vlaneseq
    %v538 = vshrl.u32 %v537, 7
    %v539 = vsub.s32 0, %v538
    %v540 = vrot.slane %v535, %v539
    %v543 = vsel %vm446, %v530, 0
    %545 = vmatprep.subr.mxu0 0.0
    %546 = vmatpush1.msra.mxu0 0.0
    %547 = vmatprep.subr.mxu0 0.0
    %548 = vmatpush1.msra.mxu0 0.0
    %549 = vmatprep.subr.mxu0 0.0
    %550 = vmatpush1.msra.mxu0 0.0
    %551 = vmatprep.subr.mxu0 0.0
    %552 = vmatpush1.msra.mxu0 0.0
    %553 = vmatprep.subr.mxu0 0.0
    %554 = vmatpush1.msra.mxu0 0.0
    %555 = vmatprep.subr.mxu0 0.0
    %556 = vmatpush1.msra.mxu0 0.0
    %557 = vmatprep.subr.mxu0 0.0
    %558 = vmatpush1.msra.mxu0 0.0
    %559 = vmatprep.subr.mxu0 0.0
    %560 = vmatpush1.msra.mxu0 0.0
    %561 = vmatprep.subr.mxu0 0.0
    %562 = vmatpush1.msra.mxu0 0.0
    %563 = vmatprep.subr.mxu0 0.0
    %564 = vmatpush1.msra.mxu0 0.0
    %565 = vmatprep.subr.mxu0 0.0
    %566 = vmatpush1.msra.mxu0 0.0
    %567 = vmatprep.subr.mxu0 0.0
    %568 = vmatpush1.msra.mxu0 0.0
    %569 = vmatprep.subr.mxu0 0.0
    %570 = vmatpush1.msra.mxu0 %v534
    %571 = vmatprep.subr.mxu0 0.0
    %572 = vmatpush1.msra.mxu0 %v533
    %573 = vmatprep.subr.mxu0 0.0
    %574 = vmatpush1.msra.mxu0 %v532
    %575 = vmatprep.subr.mxu0 0.0
    %576 = vmatpush1.msra.mxu0 %v531
    %577 = vmatprep.subr.mxu0 0.0
    %578 = vmatpush2.msra.mxu0 0.0
    %579 = vmatprep.subr.mxu0 0.0
    %580 = vmatpush2.msra.mxu0 0.0
    %581 = vmatprep.subr.mxu0 0.0
    %582 = vmatpush2.msra.mxu0 0.0
    %583 = vmatprep.subr.mxu0 0.0
    %584 = vmatpush2.msra.mxu0 0.0
    %585 = vmatprep.subr.mxu0 0.0
    %586 = vmatpush2.msra.mxu0 0.0
    %587 = vmatprep.subr.mxu0 0.0
    %588 = vmatpush2.msra.mxu0 0.0
    %589 = vmatprep.subr.mxu0 0.0
    %590 = vmatpush2.msra.mxu0 0.0
    %591 = vmatprep.subr.mxu0 0.0
    %592 = vmatpush2.msra.mxu0 0.0
    %593 = vmatprep.subr.mxu0 0.0
    %594 = vmatpush2.msra.mxu0 0.0
    %595 = vmatprep.subr.mxu0 0.0
    %596 = vmatpush2.msra.mxu0 0.0
    %597 = vmatprep.subr.mxu0 0.0
    %598 = vmatpush2.msra.mxu0 0.0
    %599 = vmatprep.subr.mxu0 0.0
    %600 = vmatpush2.msra.mxu0 0.0
    %601 = vmatprep.subr.mxu0 0.0
    %602 = vmatpush2.msra.mxu0 0.0
    %603 = vmatprep.subr.mxu0 0.0
    %604 = vmatpush2.msra.mxu0 0.0
    %605 = vmatprep.subr.mxu0 0.0
    %606 = vmatpush2.msra.mxu0 0.0
    %607 = vmatprep.subr.mxu0 0.0
    %608 = vmatpush2.msra.mxu0 0.0
    %609 = vmatprep.mubr.f32.mxu0 0.0
    %610 = vmatmul.mubr.f32.gmra.mxu0 %v543
    %v611 = vpop.f32.mrf.mxu0
    %v612 = vadd.f32 %v540, %v611
    %v613 = vpop.f32.mrf.mxu0
    %614 = vdwg.mxu0
    %vm615 = vcmp.gt.f32.partialorder %v612, 0.0
    %v616 = vmul.f32 %v612, 0.2
    %v617 = vsel %vm615, %v612, %v616
    %v618 = vld [vmem:[%s11] sm:$0xff]
    %v619 = vld [vmem:[%s11 + $0x8] sm:$0xff]
    %v620 = vld [vmem:[%s11 + $0x10] sm:$0xff]
    %v621 = vld [vmem:[%s11 + $0x18] sm:$0xff]
    %v622 = vld [vmem:[#allocation2] sm:$0x1]
    %v624 = vlaneseq
    %v625 = vshrl.u32 %v624, 7
    %v626 = vsub.s32 0, %v625
    %v627 = vrot.slane %v622, %v626
    %v630 = vsel %vm446, %v617, 0
    %632 = vmatprep.subr.mxu0 0.0
    %633 = vmatpush1.msra.mxu0 0.0
    %634 = vmatprep.subr.mxu0 0.0
    %635 = vmatpush1.msra.mxu0 0.0
    %636 = vmatprep.subr.mxu0 0.0
    %637 = vmatpush1.msra.mxu0 0.0
    %638 = vmatprep.subr.mxu0 0.0
    %639 = vmatpush1.msra.mxu0 0.0
    %640 = vmatprep.subr.mxu0 0.0
    %641 = vmatpush1.msra.mxu0 0.0
    %642 = vmatprep.subr.mxu0 0.0
    %643 = vmatpush1.msra.mxu0 0.0
    %644 = vmatprep.subr.mxu0 0.0
    %645 = vmatpush1.msra.mxu0 0.0
    %646 = vmatprep.subr.mxu0 0.0
    %647 = vmatpush1.msra.mxu0 0.0
    %648 = vmatprep.subr.mxu0 0.0
    %649 = vmatpush1.msra.mxu0 0.0
    %650 = vmatprep.subr.mxu0 0.0
    %651 = vmatpush1.msra.mxu0 0.0
    %652 = vmatprep.subr.mxu0 0.0
    %653 = vmatpush1.msra.mxu0 0.0
    %654 = vmatprep.subr.mxu0 0.0
    %655 = vmatpush1.msra.mxu0 0.0
    %656 = vmatprep.subr.mxu0 0.0
    %657 = vmatpush1.msra.mxu0 %v621
    %658 = vmatprep.subr.mxu0 0.0
    %659 = vmatpush1.msra.mxu0 %v620
    %660 = vmatprep.subr.mxu0 0.0
    %661 = vmatpush1.msra.mxu0 %v619
    %662 = vmatprep.subr.mxu0 0.0
    %663 = vmatpush1.msra.mxu0 %v618
    %664 = vmatprep.subr.mxu0 0.0
    %665 = vmatpush2.msra.mxu0 0.0
    %666 = vmatprep.subr.mxu0 0.0
    %667 = vmatpush2.msra.mxu0 0.0
    %668 = vmatprep.subr.mxu0 0.0
    %669 = vmatpush2.msra.mxu0 0.0
    %670 = vmatprep.subr.mxu0 0.0
    %671 = vmatpush2.msra.mxu0 0.0
    %672 = vmatprep.subr.mxu0 0.0
    %673 = vmatpush2.msra.mxu0 0.0
    %674 = vmatprep.subr.mxu0 0.0
    %675 = vmatpush2.msra.mxu0 0.0
    %676 = vmatprep.subr.mxu0 0.0
    %677 = vmatpush2.msra.mxu0 0.0
    %678 = vmatprep.subr.mxu0 0.0
    %679 = vmatpush2.msra.mxu0 0.0
    %680 = vmatprep.subr.mxu0 0.0
    %681 = vmatpush2.msra.mxu0 0.0
    %682 = vmatprep.subr.mxu0 0.0
    %683 = vmatpush2.msra.mxu0 0.0
    %684 = vmatprep.subr.mxu0 0.0
    %685 = vmatpush2.msra.mxu0 0.0
    %686 = vmatprep.subr.mxu0 0.0
    %687 = vmatpush2.msra.mxu0 0.0
    %688 = vmatprep.subr.mxu0 0.0
    %689 = vmatpush2.msra.mxu0 0.0
    %690 = vmatprep.subr.mxu0 0.0
    %691 = vmatpush2.msra.mxu0 0.0
    %692 = vmatprep.subr.mxu0 0.0
    %693 = vmatpush2.msra.mxu0 0.0
    %694 = vmatprep.subr.mxu0 0.0
    %695 = vmatpush2.msra.mxu0 0.0
    %696 = vmatprep.mubr.f32.mxu0 0.0
    %697 = vmatmul.mubr.f32.gmra.mxu0 %v630
    %v698 = vpop.f32.mrf.mxu0
    %v699 = vadd.f32 %v627, %v698
    %v700 = vpop.f32.mrf.mxu0
    %701 = vdwg.mxu0
    %v702 = vxor.u32 %v699, 2147483648
    %v703 = vmul.f32 %v702, 1.442695
    %v704 = vpow.pop %v703
    %v705 = vadd.f32 %v704, 1.0
    %v706 = vrcp.pop %v705
    %v707 = vmul.f32 1.0, %v706
    %v708 = vmax.f32 %v707, 1e-07
    %v709 = vmin.f32 %v708, 0.9999999
    %vm710 = vcmask 7168
    %711 = vst.msk [vmem:[%s13] sm:$0xff] %vm710, %v709
    // Predicated region
    $region58: #{tpu_custom_call.1} parent=1 // pred_check
      _
    $region59: #{tpu_custom_call.1} parent=1 // pred_check_branch
      %713 = sbr.rel (0) target = $region61
    $region60: #{tpu_custom_call.1} parent=1 // pred_region
      _
    $region61: #{tpu_custom_call.1} parent=1 // pred_fallthru
      _
    // Predicated region
    $region62: #{tpu_custom_call.1} parent=1 // pred_check
      _
    $region63: #{tpu_custom_call.1} parent=1 // pred_check_branch
      %715 = sbr.rel (0) target = $region65
    $region64: #{tpu_custom_call.1} parent=1 // pred_region
      _
    $region65: #{tpu_custom_call.1} parent=1 // pred_fallthru
      _
    %716 = vsyncpa [#allocation4], 1

</llo_original>
